<compile_context>
chip_gen: v6e
topology: v6e:2x2x1
jax: 0.10.0
libtpu: 0.0.40
codegen_flags: <defaults>
</compile_context>

<pallas_src>
import jax
import jax.numpy as jnp
from jax import lax
from jax.experimental import pallas as pl
from jax.experimental.pallas import tpu as pltpu


def lstm_kernel(max_len_ref,   # SMEM (1,)        int32   scalar prefetch: max(lengths)
                len_ref,       # VMEM (Bc, 1)     int32   true sequence lengths
                emb_ref,       # VMEM (Tc, Bc, E) compute dtype, time chunk
                wih_ref,       # VMEM (E, 4H)     compute dtype (gate-fused)
                whh_ref,       # VMEM (H, 4H)     compute dtype (gate-fused)
                b_ref,         # VMEM (1, 4H)     f32 (b_ih + b_hh)
                wout_ref,      # VMEM (H, C)      compute dtype
                bout_ref,      # VMEM (1, C)      f32
                out_ref,       # VMEM (Bc, C)     f32 log-probs (written on last chunk)
                h_ref,         # VMEM (Bc, H)     f32 scratch, persists across grid
                c_ref,         # VMEM (Bc, H)     f32 scratch, persists across grid
                xp_ref):       # VMEM (Tc, Bc, 4H) f32 scratch: chunk input projection
    Tc, _Bc, _E = emb_ref.shape
    H = whh_ref.shape[0]
    ti = pl.program_id(1)
    n_t = pl.num_programs(1)
    chunk_start = ti * Tc

    # Fresh (h, c) at the first time chunk of every batch tile.
    @pl.when(ti == 0)
    def _():
        h_ref[...] = jnp.zeros_like(h_ref)
        c_ref[...] = jnp.zeros_like(c_ref)

    # Skip chunks that are entirely past max(lengths) (padding-only work).
    @pl.when(chunk_start < max_len_ref[0])
    def _():
        # ---- input projection, hoisted out of the recurrence ---------------
        # Gates fused: one (Bc, E) @ (E, 4H) dot per timestep instead of four.
        # Bias folded here (loop-invariant), not inside the serial loop.
        wih = wih_ref[...]
        bias = b_ref[...]
        for t in range(Tc):                       # static; dots are independent
            xp_ref[t] = (jnp.dot(emb_ref[t], wih,
                                 preferred_element_type=jnp.float32) + bias)

        # ---- serial recurrence: small h @ Whh dot + EUP work per step ------
        whh = whh_ref[...]
        lengths = len_ref[...]                    # (Bc, 1), hoisted out of loop

        def step(lt, carry):
            h, c = carry
            gates = xp_ref[lt] + jnp.dot(h.astype(whh.dtype), whh,
                                         preferred_element_type=jnp.float32)
            i_g = jax.nn.sigmoid(gates[:, 0 * H:1 * H])
            f_g = jax.nn.sigmoid(gates[:, 1 * H:2 * H])
            g_g = jnp.tanh(gates[:, 2 * H:3 * H])
            o_g = jax.nn.sigmoid(gates[:, 3 * H:4 * H])
            c_new = f_g * c + i_g * g_g
            h_new = o_g * jnp.tanh(c_new)
            # pack_padded_sequence semantics: state freezes past each row's length.
            valid = (chunk_start + lt) < lengths  # (Bc, 1) bool
            return jnp.where(valid, h_new, h), jnp.where(valid, c_new, c)

        h, c = lax.fori_loop(0, Tc, step, (h_ref[...], c_ref[...]), unroll=2)
        h_ref[...] = h
        c_ref[...] = c

    # ---- output head + log_softmax on the last time chunk ------------------
    # (C is tiny here; at scale keep C lane-dense / a multiple of 128 so the
    #  store is an unmasked vst.)
    @pl.when(ti == n_t - 1)
    def _():
        h = h_ref[...]
        logits = (jnp.dot(h.astype(wout_ref.dtype), wout_ref[...],
                          preferred_element_type=jnp.float32) + bout_ref[...])
        m = jnp.max(logits, axis=1, keepdims=True)
        shifted = logits - m
        lse = jnp.log(jnp.sum(jnp.exp(shifted), axis=1, keepdims=True))
        out_ref[...] = shifted - lse


def lstm_forward(inputs, lengths, params, *, time_block=8,
                 compute_dtype=jnp.float32):
    """Embedding lookup (glue) + Pallas LSTM / Linear / log_softmax kernel."""
    B, T = inputs.shape
    E = params["embedding"].shape[1]
    H = params["w_hh"].shape[0]
    C = params["b_out"].shape[-1]

    # Gather directly in time-major layout (T, B, E); no separate activation
    # transpose needed.
    emb_tm = params["embedding"].astype(compute_dtype)[inputs.T]

    # Matmul operands in compute_dtype (bf16 recommended on v5e/v6e/v7x);
    # accumulation, biases and recurrent state stay f32.
    wih = params["w_ih"].astype(compute_dtype)
    whh = params["w_hh"].astype(compute_dtype)
    wout = params["w_out"].astype(compute_dtype)
    bias = params["b"].astype(jnp.float32)
    bout = params["b_out"].astype(jnp.float32)

    # Time-chunk grid: Tc steps per chunk; pad T up to a multiple of Tc
    # (padded steps are masked by the length check anyway).
    Tc = max(1, min(int(time_block), T))
    T_pad = ((T + Tc - 1) // Tc) * Tc
    if T_pad != T:
        emb_tm = jnp.pad(emb_tm, ((0, T_pad - T), (0, 0), (0, 0)))
    n_t = T_pad // Tc

    # Batch grid axis ("parallel") so Mosaic can shard batch tiles across the
    # two TensorCores on v7x. One tile at these toy sizes; at scale pick a
    # batch tile that is a multiple of 8 (ideally 128) rows.
    Bc = B
    n_b = B // Bc

    lengths2d = lengths.astype(jnp.int32).reshape(B, 1)
    max_len = jnp.max(lengths).astype(jnp.int32).reshape(1)   # -> SMEM prefetch

    grid_spec = pltpu.PrefetchScalarGridSpec(
        num_scalar_prefetch=1,                                 # max_len
        grid=(n_b, n_t),
        in_specs=[
            pl.BlockSpec((Bc, 1), lambda bi, ti, ml: (bi, 0)),           # lengths
            pl.BlockSpec((Tc, Bc, E), lambda bi, ti, ml: (ti, bi, 0)),   # emb chunk
            pl.BlockSpec((E, 4 * H), lambda bi, ti, ml: (0, 0)),         # w_ih (resident)
            pl.BlockSpec((H, 4 * H), lambda bi, ti, ml: (0, 0)),         # w_hh (resident)
            pl.BlockSpec((1, 4 * H), lambda bi, ti, ml: (0, 0)),         # bias
            pl.BlockSpec((H, C), lambda bi, ti, ml: (0, 0)),             # w_out
            pl.BlockSpec((1, C), lambda bi, ti, ml: (0, 0)),             # b_out
        ],
        out_specs=pl.BlockSpec((Bc, C), lambda bi, ti, ml: (bi, 0)),
        scratch_shapes=[
            pltpu.VMEM((Bc, H), jnp.float32),             # h (carried over chunks)
            pltpu.VMEM((Bc, H), jnp.float32),             # c (carried over chunks)
            pltpu.VMEM((Tc, Bc, 4 * H), jnp.float32),     # chunk input projection
        ],
    )

    return pl.pallas_call(
        lstm_kernel,
        out_shape=jax.ShapeDtypeStruct((B, C), jnp.float32),
        grid_spec=grid_spec,
        compiler_params=pltpu.CompilerParams(
            # batch axis parallel (megacore), time axis sequential recurrence
            dimension_semantics=("parallel", "arbitrary"),
            # Explicit budget: resident weights + 2 double-buffered emb chunks
            # + h/c/xp scratch must fit; 32 MiB keeps pipelining alive on
            # v7x's 64 MiB VMEM and is far above what these tiles need.
            vmem_limit_bytes=32 * 1024 * 1024,
        ),
    )(max_len, lengths2d, emb_tm, wih, whh, bias, wout, bout)


def reference_forward(inputs, lengths, params, compute_dtype=jnp.float32):
    """Pure-JAX reference of the same forward pass (for validation)."""
    emb = params["embedding"][inputs].astype(compute_dtype)   # (B, T, E)
    wih = params["w_ih"].astype(compute_dtype)
    whh = params["w_hh"].astype(compute_dtype)
    wout = params["w_out"].astype(compute_dtype)
    b = params["b"]
    bout = params["b_out"]
    B, T, _ = emb.shape
    H = params["w_hh"].shape[0]
    h = jnp.zeros((B, H), jnp.float32)
    c = jnp.zeros((B, H), jnp.float32)
    for t in range(T):
        x_t = emb[:, t, :]
        gates = (jnp.dot(x_t, wih, preferred_element_type=jnp.float32)
                 + jnp.dot(h.astype(compute_dtype), whh,
                           preferred_element_type=jnp.float32) + b)
        i_g = jax.nn.sigmoid(gates[:, 0 * H:1 * H])
        f_g = jax.nn.sigmoid(gates[:, 1 * H:2 * H])
        g_g = jnp.tanh(gates[:, 2 * H:3 * H])
        o_g = jax.nn.sigmoid(gates[:, 3 * H:4 * H])
        c_new = f_g * c + i_g * g_g
        h_new = o_g * jnp.tanh(c_new)
        valid = (t < lengths)[:, None]
        h = jnp.where(valid, h_new, h)
        c = jnp.where(valid, c_new, c)
    logits = jnp.dot(h.astype(compute_dtype), wout,
                     preferred_element_type=jnp.float32) + bout
    return jax.nn.log_softmax(logits, axis=1)


def init_params(key, vocab_size, embedding_dim, hidden_dim, num_class):
    ks = jax.random.split(key, 6)
    scale = 1.0 / jnp.sqrt(hidden_dim)
    return {
        # nn.Embedding(vocab_size, embedding_dim)
        "embedding": jax.random.normal(ks[0], (vocab_size, embedding_dim),
                                       jnp.float32),
        # nn.LSTM(embedding_dim, hidden_dim): gate-FUSED layouts, columns [i|f|g|o]
        "w_ih": jax.random.uniform(ks[1], (embedding_dim, 4 * hidden_dim),
                                   jnp.float32, -scale, scale),
        "w_hh": jax.random.uniform(ks[2], (hidden_dim, 4 * hidden_dim),
                                   jnp.float32, -scale, scale),
        # combined bias b_ih + b_hh
        "b": jax.random.uniform(ks[3], (1, 4 * hidden_dim),
                                jnp.float32, -scale, scale),
        # nn.Linear(hidden_dim, num_class)
        "w_out": jax.random.uniform(ks[4], (hidden_dim, num_class),
                                    jnp.float32, -scale, scale),
        "b_out": jax.random.uniform(ks[5], (1, num_class),
                                    jnp.float32, -scale, scale),
    }


if __name__ == "__main__":
    vocab_size, embedding_dim, hidden_dim, num_class = 8, 3, 5, 2

    key = jax.random.PRNGKey(0)
    params = init_params(key, vocab_size, embedding_dim, hidden_dim, num_class)

    # matches the module's example: inputs (B=2, T=4) of token ids
    inputs = jnp.array([[0, 1, 2, 1],
                        [4, 6, 6, 7]], dtype=jnp.int32)
    # `lengths` is a free variable in the original forward (pack_padded_sequence
    # input); we make it an explicit argument.
    lengths = jnp.array([4, 3], dtype=jnp.int32)

    # f32 path: exact PyTorch forward semantics (time_block=2 -> 2 time chunks,
    # exercising the chunked grid, scratch carry and last-chunk output write).
    out_f32 = jax.block_until_ready(
        lstm_forward(inputs, lengths, params, time_block=2,
                     compute_dtype=jnp.float32))
    ref_f32 = jax.block_until_ready(
        reference_forward(inputs, lengths, params, jnp.float32))
    assert out_f32.shape == (2, num_class)
    assert jnp.allclose(out_f32, ref_f32, atol=1e-3, rtol=1e-3), (out_f32, ref_f32)

    # bf16 matmul-operand path (f32 accumulation and state): the recommended
    # perf configuration; validated against a reference casting identically.
    out_bf16 = jax.block_until_ready(
        lstm_forward(inputs, lengths, params, time_block=2,
                     compute_dtype=jnp.bfloat16))
    ref_bf16 = jax.block_until_ready(
        reference_forward(inputs, lengths, params, jnp.bfloat16))
    assert jnp.allclose(out_bf16, ref_bf16, atol=5e-3, rtol=5e-3), (out_bf16, ref_bf16)

    print("KERNEL_OK")
</pallas_src>

<mosaic_0001>
module attributes {stable_mosaic.version = 11 : i64} {
  func.func @lstm_kernel(%arg0: i32, %arg1: i32, %arg2: memref<1xi32, #tpu.memory_space<smem>>, %arg3: memref<2x1xi32, #tpu.memory_space<vmem>>, %arg4: memref<2x2x3xf32, #tpu.memory_space<vmem>>, %arg5: memref<3x20xf32, #tpu.memory_space<vmem>>, %arg6: memref<5x20xf32, #tpu.memory_space<vmem>>, %arg7: memref<1x20xf32, #tpu.memory_space<vmem>>, %arg8: memref<5x2xf32, #tpu.memory_space<vmem>>, %arg9: memref<1x2xf32, #tpu.memory_space<vmem>>, %arg10: memref<2x2xf32, #tpu.memory_space<vmem>>, %arg11: memref<2x5xf32, #tpu.memory_space<vmem>>, %arg12: memref<2x5xf32, #tpu.memory_space<vmem>>, %arg13: memref<2x2x20xf32, #tpu.memory_space<vmem>>) attributes {dimension_semantics = [#tpu.dimension_semantics<parallel>, #tpu.dimension_semantics<arbitrary>], iteration_bounds = array<i64: 1, 2>, scalar_prefetch = 1 : i64, scratch_operands = 3 : i64, tpu.core_type = #tpu.core_type<tc>, window_params = [{transform_indices = @transform_0, window_bounds = array<i64: 2, 1>}, {transform_indices = @transform_1, window_bounds = array<i64: 2, 2, 3>}, {pipeline_mode = #tpu.pipeline_mode<synchronous>, transform_indices = @transform_2, window_bounds = array<i64: 3, 20>}, {pipeline_mode = #tpu.pipeline_mode<synchronous>, transform_indices = @transform_3, window_bounds = array<i64: 5, 20>}, {pipeline_mode = #tpu.pipeline_mode<synchronous>, transform_indices = @transform_4, window_bounds = array<i64: 1, 20>}, {pipeline_mode = #tpu.pipeline_mode<synchronous>, transform_indices = @transform_5, window_bounds = array<i64: 5, 2>}, {pipeline_mode = #tpu.pipeline_mode<synchronous>, transform_indices = @transform_6, window_bounds = array<i64: 1, 2>}, {transform_indices = @transform_7, window_bounds = array<i64: 2, 2>}]} {
    %c2_i32 = arith.constant 2 : i32
    %0 = arith.muli %arg1, %c2_i32 : i32
    %c0_i32 = arith.constant 0 : i32
    %1 = arith.cmpi eq, %arg1, %c0_i32 : i32
    %2 = arith.extui %1 : i1 to i32
    %c0_i32_0 = arith.constant 0 : i32
    %3 = arith.cmpi ne, %2, %c0_i32_0 : i32
    scf.if %3 {
      %cst = arith.constant 0.000000e+00 : f32
      %11 = vector.broadcast %cst : f32 to vector<2x5xf32>
      %c0_3 = arith.constant 0 : index
      %c0_4 = arith.constant 0 : index
      %12 = vector.load %arg11[%c0_3, %c0_4] : memref<2x5xf32, #tpu.memory_space<vmem>>, vector<2x5xf32>
      tpu.vector_store %arg11[%c0_3, %c0_4], %11 {strides = array<i32>} : memref<2x5xf32, #tpu.memory_space<vmem>>, vector<2x5xf32>,
      %cst_5 = arith.constant 0.000000e+00 : f32
      %13 = vector.broadcast %cst_5 : f32 to vector<2x5xf32>
      %c0_6 = arith.constant 0 : index
      %c0_7 = arith.constant 0 : index
      %14 = vector.load %arg12[%c0_6, %c0_7] : memref<2x5xf32, #tpu.memory_space<vmem>>, vector<2x5xf32>
      tpu.vector_store %arg12[%c0_6, %c0_7], %13 {strides = array<i32>} : memref<2x5xf32, #tpu.memory_space<vmem>>, vector<2x5xf32>,
    } else {
    }
    %c0 = arith.constant 0 : index
    %4 = memref.load %arg2[%c0] : memref<1xi32, #tpu.memory_space<smem>>
    %5 = arith.cmpi slt, %0, %4 : i32
    %6 = arith.extui %5 : i1 to i32
    %c0_i32_1 = arith.constant 0 : i32
    %7 = arith.cmpi ne, %6, %c0_i32_1 : i32
    scf.if %7 {
      %c0_3 = arith.constant 0 : index
      %c0_4 = arith.constant 0 : index
      %11 = vector.load %arg5[%c0_3, %c0_4] : memref<3x20xf32, #tpu.memory_space<vmem>>, vector<3x20xf32>
      %c0_5 = arith.constant 0 : index
      %c0_6 = arith.constant 0 : index
      %12 = vector.load %arg7[%c0_5, %c0_6] : memref<1x20xf32, #tpu.memory_space<vmem>>, vector<1x20xf32>
      %c0_7 = arith.constant 0 : index
      %c0_8 = arith.constant 0 : index
      %c0_9 = arith.constant 0 : index
      %13 = vector.load %arg4[%c0_7, %c0_8, %c0_9] : memref<2x2x3xf32, #tpu.memory_space<vmem>>, vector<1x2x3xf32>
      %14 = vector.shape_cast %13 : vector<1x2x3xf32> to vector<2x3xf32>
      %cst = arith.constant dense<0.000000e+00> : vector<2x20xf32>
      %15 = tpu.matmul %14, %11, %cst {dimension_numbers = #tpu.dot_dimension_numbers<[1], [0], [0], [1], [0, 0, 1, 1], [], []>} : vector<2x3xf32>, vector<3x20xf32>, vector<2x20xf32> -> vector<2x20xf32>
      %16 = vector.broadcast %12 : vector<1x20xf32> to vector<2x20xf32>
      %17 = arith.addf %15, %16 : vector<2x20xf32>
      %c0_10 = arith.constant 0 : index
      %c0_11 = arith.constant 0 : index
      %c0_12 = arith.constant 0 : index
      %18 = vector.load %arg13[%c0_10, %c0_11, %c0_12] : memref<2x2x20xf32, #tpu.memory_space<vmem>>, vector<1x2x20xf32>
      %19 = vector.shape_cast %18 : vector<1x2x20xf32> to vector<2x20xf32>
      %20 = vector.shape_cast %17 : vector<2x20xf32> to vector<1x2x20xf32>
      tpu.vector_store %arg13[%c0_10, %c0_11, %c0_12], %20 {strides = array<i32>} : memref<2x2x20xf32, #tpu.memory_space<vmem>>, vector<1x2x20xf32>,
      %c1 = arith.constant 1 : index
      %c0_13 = arith.constant 0 : index
      %c0_14 = arith.constant 0 : index
      %21 = vector.load %arg4[%c1, %c0_13, %c0_14] : memref<2x2x3xf32, #tpu.memory_space<vmem>>, vector<1x2x3xf32>
      %22 = vector.shape_cast %21 : vector<1x2x3xf32> to vector<2x3xf32>
      %cst_15 = arith.constant dense<0.000000e+00> : vector<2x20xf32>
      %23 = tpu.matmul %22, %11, %cst_15 {dimension_numbers = #tpu.dot_dimension_numbers<[1], [0], [0], [1], [0, 0, 1, 1], [], []>} : vector<2x3xf32>, vector<3x20xf32>, vector<2x20xf32> -> vector<2x20xf32>
      %24 = vector.broadcast %12 : vector<1x20xf32> to vector<2x20xf32>
      %25 = arith.addf %23, %24 : vector<2x20xf32>
      %c1_16 = arith.constant 1 : index
      %c0_17 = arith.constant 0 : index
      %c0_18 = arith.constant 0 : index
      %26 = vector.load %arg13[%c1_16, %c0_17, %c0_18] : memref<2x2x20xf32, #tpu.memory_space<vmem>>, vector<1x2x20xf32>
      %27 = vector.shape_cast %26 : vector<1x2x20xf32> to vector<2x20xf32>
      %28 = vector.shape_cast %25 : vector<2x20xf32> to vector<1x2x20xf32>
      tpu.vector_store %arg13[%c1_16, %c0_17, %c0_18], %28 {strides = array<i32>} : memref<2x2x20xf32, #tpu.memory_space<vmem>>, vector<1x2x20xf32>,
      %c0_19 = arith.constant 0 : index
      %c0_20 = arith.constant 0 : index
      %29 = vector.load %arg6[%c0_19, %c0_20] : memref<5x20xf32, #tpu.memory_space<vmem>>, vector<5x20xf32>
      %c0_21 = arith.constant 0 : index
      %c0_22 = arith.constant 0 : index
      %30 = vector.load %arg3[%c0_21, %c0_22] : memref<2x1xi32, #tpu.memory_space<vmem>>, vector<2x1xi32>
      %c0_23 = arith.constant 0 : index
      %c0_24 = arith.constant 0 : index
      %31 = vector.load %arg11[%c0_23, %c0_24] : memref<2x5xf32, #tpu.memory_space<vmem>>, vector<2x5xf32>
      %c0_25 = arith.constant 0 : index
      %c0_26 = arith.constant 0 : index
      %32 = vector.load %arg12[%c0_25, %c0_26] : memref<2x5xf32, #tpu.memory_space<vmem>>, vector<2x5xf32>
      %c0_i32_27 = arith.constant 0 : i32
      %33 = arith.index_cast %c0_i32_27 : i32 to index
      %c0_28 = arith.constant 0 : index
      %c0_29 = arith.constant 0 : index
      %34 = vector.load %arg13[%33, %c0_28, %c0_29] : memref<2x2x20xf32, #tpu.memory_space<vmem>>, vector<1x2x20xf32>
      %35 = vector.shape_cast %34 : vector<1x2x20xf32> to vector<2x20xf32>
      %cst_30 = arith.constant dense<0.000000e+00> : vector<2x20xf32>
      %36 = tpu.matmul %31, %29, %cst_30 {dimension_numbers = #tpu.dot_dimension_numbers<[1], [0], [0], [1], [0, 0, 1, 1], [], []>} : vector<2x5xf32>, vector<5x20xf32>, vector<2x20xf32> -> vector<2x20xf32>
      %37 = arith.addf %35, %36 : vector<2x20xf32>
      %38 = vector.extract_strided_slice %37 {offsets = [0, 0], sizes = [2, 5], strides = [1, 1]} : vector<2x20xf32> to vector<2x5xf32>
      %39 = arith.negf %38 : vector<2x5xf32>
      %40 = math.exp %39 : vector<2x5xf32>
      %cst_31 = arith.constant 1.000000e+00 : f32
      %41 = vector.broadcast %cst_31 : f32 to vector<2x5xf32>
      %42 = arith.addf %41, %40 : vector<2x5xf32>
      %43 = arith.divf %41, %42 : vector<2x5xf32>
      %44 = vector.extract_strided_slice %37 {offsets = [0, 5], sizes = [2, 5], strides = [1, 1]} : vector<2x20xf32> to vector<2x5xf32>
      %45 = arith.negf %44 : vector<2x5xf32>
      %46 = math.exp %45 : vector<2x5xf32>
      %cst_32 = arith.constant 1.000000e+00 : f32
      %47 = vector.broadcast %cst_32 : f32 to vector<2x5xf32>
      %48 = arith.addf %47, %46 : vector<2x5xf32>
      %49 = arith.divf %47, %48 : vector<2x5xf32>
      %50 = vector.extract_strided_slice %37 {offsets = [0, 10], sizes = [2, 5], strides = [1, 1]} : vector<2x20xf32> to vector<2x5xf32>
      %51 = math.tanh %50 : vector<2x5xf32>
      %52 = vector.extract_strided_slice %37 {offsets = [0, 15], sizes = [2, 5], strides = [1, 1]} : vector<2x20xf32> to vector<2x5xf32>
      %53 = arith.negf %52 : vector<2x5xf32>
      %54 = math.exp %53 : vector<2x5xf32>
      %cst_33 = arith.constant 1.000000e+00 : f32
      %55 = vector.broadcast %cst_33 : f32 to vector<2x5xf32>
      %56 = arith.addf %55, %54 : vector<2x5xf32>
      %57 = arith.divf %55, %56 : vector<2x5xf32>
      %58 = arith.mulf %49, %32 : vector<2x5xf32>
      %59 = arith.mulf %43, %51 : vector<2x5xf32>
      %60 = arith.addf %58, %59 : vector<2x5xf32>
      %61 = math.tanh %60 : vector<2x5xf32>
      %62 = arith.mulf %57, %61 : vector<2x5xf32>
      %63 = arith.addi %0, %c0_i32_27 : i32
      %64 = vector.broadcast %63 : i32 to vector<2x1xi32>
      %65 = arith.cmpi slt, %64, %30 : vector<2x1xi32>
      %66 = vector.shape_cast %65 : vector<2x1xi1> to vector<2x1xi1>
      %67 = vector.broadcast %66 : vector<2x1xi1> to vector<2x5xi1>
      %68 = arith.select %67, %62, %31 : vector<2x5xi1>, vector<2x5xf32>
      %69 = vector.shape_cast %65 : vector<2x1xi1> to vector<2x1xi1>
      %70 = vector.broadcast %69 : vector<2x1xi1> to vector<2x5xi1>
      %71 = arith.select %70, %60, %32 : vector<2x5xi1>, vector<2x5xf32>
      %c1_i32_34 = arith.constant 1 : i32
      %72 = arith.index_cast %c1_i32_34 : i32 to index
      %c0_35 = arith.constant 0 : index
      %c0_36 = arith.constant 0 : index
      %73 = vector.load %arg13[%72, %c0_35, %c0_36] : memref<2x2x20xf32, #tpu.memory_space<vmem>>, vector<1x2x20xf32>
      %74 = vector.shape_cast %73 : vector<1x2x20xf32> to vector<2x20xf32>
      %cst_37 = arith.constant dense<0.000000e+00> : vector<2x20xf32>
      %75 = tpu.matmul %68, %29, %cst_37 {dimension_numbers = #tpu.dot_dimension_numbers<[1], [0], [0], [1], [0, 0, 1, 1], [], []>} : vector<2x5xf32>, vector<5x20xf32>, vector<2x20xf32> -> vector<2x20xf32>
      %76 = arith.addf %74, %75 : vector<2x20xf32>
      %77 = vector.extract_strided_slice %76 {offsets = [0, 0], sizes = [2, 5], strides = [1, 1]} : vector<2x20xf32> to vector<2x5xf32>
      %78 = arith.negf %77 : vector<2x5xf32>
      %79 = math.exp %78 : vector<2x5xf32>
      %cst_38 = arith.constant 1.000000e+00 : f32
      %80 = vector.broadcast %cst_38 : f32 to vector<2x5xf32>
      %81 = arith.addf %80, %79 : vector<2x5xf32>
      %82 = arith.divf %80, %81 : vector<2x5xf32>
      %83 = vector.extract_strided_slice %76 {offsets = [0, 5], sizes = [2, 5], strides = [1, 1]} : vector<2x20xf32> to vector<2x5xf32>
      %84 = arith.negf %83 : vector<2x5xf32>
      %85 = math.exp %84 : vector<2x5xf32>
      %cst_39 = arith.constant 1.000000e+00 : f32
      %86 = vector.broadcast %cst_39 : f32 to vector<2x5xf32>
      %87 = arith.addf %86, %85 : vector<2x5xf32>
      %88 = arith.divf %86, %87 : vector<2x5xf32>
      %89 = vector.extract_strided_slice %76 {offsets = [0, 10], sizes = [2, 5], strides = [1, 1]} : vector<2x20xf32> to vector<2x5xf32>
      %90 = math.tanh %89 : vector<2x5xf32>
      %91 = vector.extract_strided_slice %76 {offsets = [0, 15], sizes = [2, 5], strides = [1, 1]} : vector<2x20xf32> to vector<2x5xf32>
      %92 = arith.negf %91 : vector<2x5xf32>
      %93 = math.exp %92 : vector<2x5xf32>
      %cst_40 = arith.constant 1.000000e+00 : f32
      %94 = vector.broadcast %cst_40 : f32 to vector<2x5xf32>
      %95 = arith.addf %94, %93 : vector<2x5xf32>
      %96 = arith.divf %94, %95 : vector<2x5xf32>
      %97 = arith.mulf %88, %71 : vector<2x5xf32>
      %98 = arith.mulf %82, %90 : vector<2x5xf32>
      %99 = arith.addf %97, %98 : vector<2x5xf32>
      %100 = math.tanh %99 : vector<2x5xf32>
      %101 = arith.mulf %96, %100 : vector<2x5xf32>
      %102 = arith.addi %0, %c1_i32_34 : i32
      %103 = vector.broadcast %102 : i32 to vector<2x1xi32>
      %104 = arith.cmpi slt, %103, %30 : vector<2x1xi32>
      %105 = vector.shape_cast %104 : vector<2x1xi1> to vector<2x1xi1>
      %106 = vector.broadcast %105 : vector<2x1xi1> to vector<2x5xi1>
      %107 = arith.select %106, %101, %68 : vector<2x5xi1>, vector<2x5xf32>
      %108 = vector.shape_cast %104 : vector<2x1xi1> to vector<2x1xi1>
      %109 = vector.broadcast %108 : vector<2x1xi1> to vector<2x5xi1>
      %110 = arith.select %109, %99, %71 : vector<2x5xi1>, vector<2x5xf32>
      %c2_i32_41 = arith.constant 2 : i32
      %c0_42 = arith.constant 0 : index
      %c0_43 = arith.constant 0 : index
      %111 = vector.load %arg11[%c0_42, %c0_43] : memref<2x5xf32, #tpu.memory_space<vmem>>, vector<2x5xf32>
      tpu.vector_store %arg11[%c0_42, %c0_43], %107 {strides = array<i32>} : memref<2x5xf32, #tpu.memory_space<vmem>>, vector<2x5xf32>,
      %c0_44 = arith.constant 0 : index
      %c0_45 = arith.constant 0 : index
      %112 = vector.load %arg12[%c0_44, %c0_45] : memref<2x5xf32, #tpu.memory_space<vmem>>, vector<2x5xf32>
      tpu.vector_store %arg12[%c0_44, %c0_45], %110 {strides = array<i32>} : memref<2x5xf32, #tpu.memory_space<vmem>>, vector<2x5xf32>,
    } else {
    }
    %c1_i32 = arith.constant 1 : i32
    %8 = arith.cmpi eq, %arg1, %c1_i32 : i32
    %9 = arith.extui %8 : i1 to i32
    %c0_i32_2 = arith.constant 0 : i32
    %10 = arith.cmpi ne, %9, %c0_i32_2 : i32
    scf.if %10 {
      %c0_3 = arith.constant 0 : index
      %c0_4 = arith.constant 0 : index
      %11 = vector.load %arg11[%c0_3, %c0_4] : memref<2x5xf32, #tpu.memory_space<vmem>>, vector<2x5xf32>
      %c0_5 = arith.constant 0 : index
      %c0_6 = arith.constant 0 : index
      %12 = vector.load %arg8[%c0_5, %c0_6] : memref<5x2xf32, #tpu.memory_space<vmem>>, vector<5x2xf32>
      %cst = arith.constant dense<0.000000e+00> : vector<2x2xf32>
      %13 = tpu.matmul %11, %12, %cst {dimension_numbers = #tpu.dot_dimension_numbers<[1], [0], [0], [1], [0, 0, 1, 1], [], []>} : vector<2x5xf32>, vector<5x2xf32>, vector<2x2xf32> -> vector<2x2xf32>
      %c0_7 = arith.constant 0 : index
      %c0_8 = arith.constant 0 : index
      %14 = vector.load %arg9[%c0_7, %c0_8] : memref<1x2xf32, #tpu.memory_space<vmem>>, vector<1x2xf32>
      %15 = vector.broadcast %14 : vector<1x2xf32> to vector<2x2xf32>
      %16 = arith.addf %13, %15 : vector<2x2xf32>
      %cst_9 = arith.constant dense<0xFF800000> : vector<2xf32>
      %17 = vector.multi_reduction <maximumf>, %16, %cst_9 [1] : vector<2x2xf32> to vector<2xf32>
      %18 = vector.shape_cast %17 : vector<2xf32> to vector<2x1xf32>
      %19 = vector.broadcast %18 : vector<2x1xf32> to vector<2x2xf32>
      %20 = arith.subf %16, %19 : vector<2x2xf32>
      %21 = math.exp %20 : vector<2x2xf32>
      %cst_10 = arith.constant dense<0.000000e+00> : vector<2xf32>
      %22 = vector.multi_reduction <add>, %21, %cst_10 [1] : vector<2x2xf32> to vector<2xf32>
      %23 = vector.shape_cast %22 : vector<2xf32> to vector<2x1xf32>
      %24 = math.log %23 : vector<2x1xf32>
      %25 = vector.broadcast %24 : vector<2x1xf32> to vector<2x2xf32>
      %26 = arith.subf %20, %25 : vector<2x2xf32>
      %c0_11 = arith.constant 0 : index
      %c0_12 = arith.constant 0 : index
      %27 = vector.load %arg10[%c0_11, %c0_12] : memref<2x2xf32, #tpu.memory_space<vmem>>, vector<2x2xf32>
      tpu.vector_store %arg10[%c0_11, %c0_12], %26 {strides = array<i32>} : memref<2x2xf32, #tpu.memory_space<vmem>>, vector<2x2xf32>,
    } else {
    }
    return
  }
  func.func @transform_0(%arg0: i32, %arg1: i32, %arg2: memref<1xi32, #tpu.memory_space<smem>>) -> (i32, i32) {
    %c0_i32 = arith.constant 0 : i32
    %c0_i32_0 = arith.constant 0 : i32
    return %arg0, %c0_i32 : i32, i32
  }
  func.func @transform_1(%arg0: i32, %arg1: i32, %arg2: memref<1xi32, #tpu.memory_space<smem>>) -> (i32, i32, i32) {
    %c0_i32 = arith.constant 0 : i32
    %c0_i32_0 = arith.constant 0 : i32
    return %arg1, %arg0, %c0_i32 : i32, i32, i32
  }
  func.func @transform_2(%arg0: i32, %arg1: i32, %arg2: memref<1xi32, #tpu.memory_space<smem>>) -> (i32, i32) {
    %c0_i32 = arith.constant 0 : i32
    %c0_i32_0 = arith.constant 0 : i32
    %c0_i32_1 = arith.constant 0 : i32
    return %c0_i32, %c0_i32_0 : i32, i32
  }
  func.func @transform_3(%arg0: i32, %arg1: i32, %arg2: memref<1xi32, #tpu.memory_space<smem>>) -> (i32, i32) {
    %c0_i32 = arith.constant 0 : i32
    %c0_i32_0 = arith.constant 0 : i32
    %c0_i32_1 = arith.constant 0 : i32
    return %c0_i32, %c0_i32_0 : i32, i32
  }
  func.func @transform_4(%arg0: i32, %arg1: i32, %arg2: memref<1xi32, #tpu.memory_space<smem>>) -> (i32, i32) {
    %c0_i32 = arith.constant 0 : i32
    %c0_i32_0 = arith.constant 0 : i32
    %c0_i32_1 = arith.constant 0 : i32
    return %c0_i32, %c0_i32_0 : i32, i32
  }
  func.func @transform_5(%arg0: i32, %arg1: i32, %arg2: memref<1xi32, #tpu.memory_space<smem>>) -> (i32, i32) {
    %c0_i32 = arith.constant 0 : i32
    %c0_i32_0 = arith.constant 0 : i32
    %c0_i32_1 = arith.constant 0 : i32
    return %c0_i32, %c0_i32_0 : i32, i32
  }
  func.func @transform_6(%arg0: i32, %arg1: i32, %arg2: memref<1xi32, #tpu.memory_space<smem>>) -> (i32, i32) {
    %c0_i32 = arith.constant 0 : i32
    %c0_i32_0 = arith.constant 0 : i32
    %c0_i32_1 = arith.constant 0 : i32
    return %c0_i32, %c0_i32_0 : i32, i32
  }
  func.func @transform_7(%arg0: i32, %arg1: i32, %arg2: memref<1xi32, #tpu.memory_space<smem>>) -> (i32, i32) {
    %c0_i32 = arith.constant 0 : i32
    %c0_i32_0 = arith.constant 0 : i32
    return %arg0, %c0_i32 : i32, i32
  }
}

</mosaic_0001>

<llo_original>
// kernel: tpu_custom_call.1
$region0: #{tpu_custom_call.1}
  #allocation0 [shape = 'u32[]', space=smem, size = 0x4, offset = 0x4, fixed_abs, tag = 'smem constant byte address 0x4 - core index']
  #allocation1 [shape = 'u32[144,128]{1,0:T(1,128)}', space=vmem, size = 0x12000, scoped, tag = 'internal scratch']
  #allocation2 [shape = 'f32[2,5]{1,0:T(2,128)}', space=vmem, size = 0x400, scoped, tag = 'scratch operand']
  #allocation3 [shape = 'f32[2,5]{1,0:T(2,128)}', space=vmem, size = 0x400, scoped, tag = 'scratch operand']
  #allocation4 [shape = 'f32[2,2,20]{2,1,0:T(2,128)}', space=vmem, size = 0x800, scoped, tag = 'scratch operand']
  #allocation5 [shape = 's32[1]{0}', space=sflag, size = 0x4, scoped, tag = 'scoped memory for tpu_custom_call.1']
  #allocation6 [shape = 's32[1]{0:T(128)S(6)}', space=smem, size = 0x200, scoped, tag = 'prefetched SMEM operand 0']
  %s0 = inlined_call_operand.<no memory space> [shape: s32[1], index: 0, kind: input, shape index: {}]
  %s1 = inlined_call_operand.vmem [shape: s32[2,1], index: 1, kind: input, shape index: {}]
  %s2 = inlined_call_operand.vmem [shape: f32[4,2,3], index: 2, kind: input, shape index: {}]
  %s3 = inlined_call_operand.vmem [shape: f32[3,20], index: 3, kind: input, shape index: {}]
  %s4 = inlined_call_operand.vmem [shape: f32[5,20], index: 4, kind: input, shape index: {}]
  %s5 = inlined_call_operand.vmem [shape: f32[1,20], index: 5, kind: input, shape index: {}]
  %s6 = inlined_call_operand.vmem [shape: f32[5,2], index: 6, kind: input, shape index: {}]
  %s7 = inlined_call_operand.vmem [shape: f32[1,2], index: 7, kind: input, shape index: {}]
  %s8 = inlined_call_operand.hbm [shape: f32[2,2], index: 8, kind: output, shape index: {}]
  %s9 = sld [smem:[#allocation0]]
  $region73: #{tpu_custom_call.1} parent=0
    _
  %s11 = ssub.s32 1, %s9
  %s12 = scalar_select 0, %s11, %s9
  %13 = sst [smem:[#allocation6]] %s0
  $region1: #{tpu_custom_call.1} parent=0
    #allocation7 [shape = 'u8[1024]{0}', space=vmem, size = 0x400, scoped, tag = 'output window, operand 0, single buffered']
    #allocation8 [shape = 's32[2]{0}', space=sflag, size = 0x8, scoped, tag = 'scoped memory for tpu_custom_call.1']
    %14 = vsyncpa [#allocation8], 0
    loop: start=0, step=1, limit=4
    $region2: #{tpu_custom_call.1} parent=1 // loop_pre_header
      _
    $region3: #{tpu_custom_call.1} parent=1 // loop_header
      %s16 = sphi 0, %s20
      %p17 = scmp.ge.s32.totalorder %s16, 4
      %s23 = sphi 0, %s35
      %s24 = sphi 0, %s31
      %s25 = sphi 0, %s23
      %s26 = sphi 0, %s24
      %s27 = sphi 0, %s25
      %s28 = sphi 0, %s26
      %s38 = sphi 0, %s40
      %s41 = sphi 0, %s38
      %s42 = sphi 0, %s41
      %s58 = sphi 0, %s42
      %s66 = sphi 0, %s68
      %s69 = sphi 0, %s66
      %s70 = sphi 0, %s69
      %s86 = sphi 0, %s70
      %s90 = sphi 0, %s90
      %s92 = sphi 0, %s90
      %s93 = sphi 0, %s92
      %s107 = sphi 0, %s93
      %s111 = sphi 0, %s111
      %s113 = sphi 0, %s111
      %s114 = sphi 0, %s113
      %s128 = sphi 0, %s114
      %s132 = sphi 0, %s132
      %s134 = sphi 0, %s132
      %s135 = sphi 0, %s134
      %s149 = sphi 0, %s135
      %s153 = sphi 0, %s153
      %s155 = sphi 0, %s153
      %s156 = sphi 0, %s155
      %s170 = sphi 0, %s156
      %s174 = sphi 0, %s174
      %s176 = sphi 0, %s174
      %s177 = sphi 0, %s176
      %s191 = sphi 0, %s177
      %s197 = sphi 0, %s199
      %s200 = sphi 0, %s197
      %s201 = sphi 0, %s200
      %s217 = sphi 0, %s201
    $region4: #{tpu_custom_call.1} parent=1 // loop_header_branch
      %19 = sbr.rel (%p17) target = $region8
    $region5: #{tpu_custom_call.1} parent=1 // loop_body
      %s21 = ssub.s32 %s16, 1
      %s22 = ssub.s32 %s16, 2
      %s29 = sadd.s32 1, %s24
      %p30 = scmp.ge.s32.totalorder %s29, 2
      %s31 = scalar_select %p30, 0, %s29
      %s32 = sadd.s32 1, %s23
      %s33 = scalar_select %p30, %s32, %s23
      %p34 = scmp.ge.s32.totalorder %s33, 1
      %s35 = scalar_select %p34, 0, %s33
      %s36 = ssub.s32 %s23, %s35
      %p37 = scmp.eq.s32.totalorder %s36, 0
      %s39 = sadd.s32 %s38, 1
      %s40 = scalar_select %p37, %s38, %s39
      %p43 = pneg %p37
      %p44 = scmp.eq.s32.totalorder %s16, 1
      %p45 = por %p43, %p44
      %p46 = scmp.ne.s32.totalorder %s38, %s41
      %p47 = scmp.eq.s32.totalorder %s16, 0
      %p48 = por %p46, %p47
      %p49 = scmp.ne.s32.totalorder %s38, %s41
      %p50 = scmp.eq.s32.totalorder %s21, 1
      %p51 = por %p49, %p50
      %p52 = scmp.ne.s32.totalorder %s41, %s42
      %p53 = scmp.eq.s32.totalorder %s21, 0
      %p54 = por %p52, %p53
      %p55 = scmp.ne.s32.totalorder %s41, %s42
      %p56 = scmp.eq.s32.totalorder %s22, 1
      %p57 = por %p55, %p56
      %p59 = scmp.ne.s32.totalorder %s42, %s58
      %p60 = scmp.eq.s32.totalorder %s22, 0
      %p61 = por %p59, %p60
      %s62 = ssub.s32 %s24, %s31
      %s63 = ssub.s32 %s23, %s35
      %s64 = sor.u32 %s62, %s63
      %p65 = scmp.eq.s32.totalorder %s64, 0
      %s67 = sadd.s32 %s66, 1
      %s68 = scalar_select %p65, %s66, %s67
      %p71 = pneg %p65
      %p72 = scmp.eq.s32.totalorder %s16, 1
      %p73 = por %p71, %p72
      %p74 = scmp.ne.s32.totalorder %s66, %s69
      %p75 = scmp.eq.s32.totalorder %s16, 0
      %p76 = por %p74, %p75
      %p77 = scmp.ne.s32.totalorder %s66, %s69
      %p78 = scmp.eq.s32.totalorder %s21, 1
      %p79 = por %p77, %p78
      %p80 = scmp.ne.s32.totalorder %s69, %s70
      %p81 = scmp.eq.s32.totalorder %s21, 0
      %p82 = por %p80, %p81
      %p83 = scmp.ne.s32.totalorder %s69, %s70
      %p84 = scmp.eq.s32.totalorder %s22, 1
      %p85 = por %p83, %p84
      %p87 = scmp.ne.s32.totalorder %s70, %s86
      %p88 = scmp.eq.s32.totalorder %s22, 0
      %p89 = por %p87, %p88
      %s91 = sadd.s32 %s90, 1
      %p94 = scmp.eq.s32.totalorder %s16, 1
      %p95 = scmp.ne.s32.totalorder %s90, %s92
      %p96 = scmp.eq.s32.totalorder %s16, 0
      %p97 = por %p95, %p96
      %p98 = scmp.ne.s32.totalorder %s90, %s92
      %p99 = scmp.eq.s32.totalorder %s21, 1
      %p100 = por %p98, %p99
      %p101 = scmp.ne.s32.totalorder %s92, %s93
      %p102 = scmp.eq.s32.totalorder %s21, 0
      %p103 = por %p101, %p102
      %p104 = scmp.ne.s32.totalorder %s92, %s93
      %p105 = scmp.eq.s32.totalorder %s22, 1
      %p106 = por %p104, %p105
      %p108 = scmp.ne.s32.totalorder %s93, %s107
      %p109 = scmp.eq.s32.totalorder %s22, 0
      %p110 = por %p108, %p109
      %s112 = sadd.s32 %s111, 1
      %p115 = scmp.eq.s32.totalorder %s16, 1
      %p116 = scmp.ne.s32.totalorder %s111, %s113
      %p117 = scmp.eq.s32.totalorder %s16, 0
      %p118 = por %p116, %p117
      %p119 = scmp.ne.s32.totalorder %s111, %s113
      %p120 = scmp.eq.s32.totalorder %s21, 1
      %p121 = por %p119, %p120
      %p122 = scmp.ne.s32.totalorder %s113, %s114
      %p123 = scmp.eq.s32.totalorder %s21, 0
      %p124 = por %p122, %p123
      %p125 = scmp.ne.s32.totalorder %s113, %s114
      %p126 = scmp.eq.s32.totalorder %s22, 1
      %p127 = por %p125, %p126
      %p129 = scmp.ne.s32.totalorder %s114, %s128
      %p130 = scmp.eq.s32.totalorder %s22, 0
      %p131 = por %p129, %p130
      %s133 = sadd.s32 %s132, 1
      %p136 = scmp.eq.s32.totalorder %s16, 1
      %p137 = scmp.ne.s32.totalorder %s132, %s134
      %p138 = scmp.eq.s32.totalorder %s16, 0
      %p139 = por %p137, %p138
      %p140 = scmp.ne.s32.totalorder %s132, %s134
      %p141 = scmp.eq.s32.totalorder %s21, 1
      %p142 = por %p140, %p141
      %p143 = scmp.ne.s32.totalorder %s134, %s135
      %p144 = scmp.eq.s32.totalorder %s21, 0
      %p145 = por %p143, %p144
      %p146 = scmp.ne.s32.totalorder %s134, %s135
      %p147 = scmp.eq.s32.totalorder %s22, 1
      %p148 = por %p146, %p147
      %p150 = scmp.ne.s32.totalorder %s135, %s149
      %p151 = scmp.eq.s32.totalorder %s22, 0
      %p152 = por %p150, %p151
      %s154 = sadd.s32 %s153, 1
      %p157 = scmp.eq.s32.totalorder %s16, 1
      %p158 = scmp.ne.s32.totalorder %s153, %s155
      %p159 = scmp.eq.s32.totalorder %s16, 0
      %p160 = por %p158, %p159
      %p161 = scmp.ne.s32.totalorder %s153, %s155
      %p162 = scmp.eq.s32.totalorder %s21, 1
      %p163 = por %p161, %p162
      %p164 = scmp.ne.s32.totalorder %s155, %s156
      %p165 = scmp.eq.s32.totalorder %s21, 0
      %p166 = por %p164, %p165
      %p167 = scmp.ne.s32.totalorder %s155, %s156
      %p168 = scmp.eq.s32.totalorder %s22, 1
      %p169 = por %p167, %p168
      %p171 = scmp.ne.s32.totalorder %s156, %s170
      %p172 = scmp.eq.s32.totalorder %s22, 0
      %p173 = por %p171, %p172
      %s175 = sadd.s32 %s174, 1
      %p178 = scmp.eq.s32.totalorder %s16, 1
      %p179 = scmp.ne.s32.totalorder %s174, %s176
      %p180 = scmp.eq.s32.totalorder %s16, 0
      %p181 = por %p179, %p180
      %p182 = scmp.ne.s32.totalorder %s174, %s176
      %p183 = scmp.eq.s32.totalorder %s21, 1
      %p184 = por %p182, %p183
      %p185 = scmp.ne.s32.totalorder %s176, %s177
      %p186 = scmp.eq.s32.totalorder %s21, 0
      %p187 = por %p185, %p186
      %p188 = scmp.ne.s32.totalorder %s176, %s177
      %p189 = scmp.eq.s32.totalorder %s22, 1
      %p190 = por %p188, %p189
      %p192 = scmp.ne.s32.totalorder %s177, %s191
      %p193 = scmp.eq.s32.totalorder %s22, 0
      %p194 = por %p192, %p193
      %s195 = ssub.s32 %s23, %s35
      %p196 = scmp.eq.s32.totalorder %s195, 0
      %s198 = sadd.s32 %s197, 1
      %s199 = scalar_select %p196, %s197, %s198
      %p202 = pneg %p196
      %p203 = scmp.eq.s32.totalorder %s16, 1
      %p204 = por %p202, %p203
      %p205 = scmp.ne.s32.totalorder %s197, %s200
      %p206 = scmp.eq.s32.totalorder %s16, 0
      %p207 = por %p205, %p206
      %p208 = scmp.ne.s32.totalorder %s197, %s200
      %p209 = scmp.eq.s32.totalorder %s21, 1
      %p210 = por %p208, %p209
      %p211 = scmp.ne.s32.totalorder %s200, %s201
      %p212 = scmp.eq.s32.totalorder %s21, 0
      %p213 = por %p211, %p212
      %p214 = scmp.ne.s32.totalorder %s200, %s201
      %p215 = scmp.eq.s32.totalorder %s22, 1
      %p216 = por %p214, %p215
      %p218 = scmp.ne.s32.totalorder %s201, %s217
      %p219 = scmp.eq.s32.totalorder %s22, 0
      %p220 = por %p218, %p219
      %p221 = scmp.le.s32.totalorder 1, %s16
      %p222 = scmp.lt.s32.totalorder %s16, 3
      %p223 = pnand %p221, %p222
      %p224 = pneg %p223
      // Predicated region
      $region9: #{tpu_custom_call.1} parent=5 // pred_check
        _
      $region10: #{tpu_custom_call.1} parent=5 // pred_check_branch
        %226 = sbr.rel (%p223) target = $region12
      $region11: #{tpu_custom_call.1} parent=5 // pred_region
        %s227 = ssub.s32 %s16, 1
        // Predicated region
        $region13: #{tpu_custom_call.1} parent=11 // pred_check
          %p228 = pneg %p54
        $region14: #{tpu_custom_call.1} parent=11 // pred_check_branch
          %230 = sbr.rel (%p228) target = $region16
        $region15: #{tpu_custom_call.1} parent=11 // pred_region
          %p231 = scmp.lt.s32.totalorder %s25, 0
          %s232 = scalar_select %p231, %s25, 0
          %s233 = smul.addr %s232, 2
          %s234 = scalar_lea.vmem %s1, %s233
        $region16: #{tpu_custom_call.1} parent=11 // pred_fallthru
          _
        // Predicated region
        $region17: #{tpu_custom_call.1} parent=11 // pred_check
          %p235 = pneg %p103
        $region18: #{tpu_custom_call.1} parent=11 // pred_check_branch
          %237 = sbr.rel (%p235) target = $region20
        $region19: #{tpu_custom_call.1} parent=11 // pred_region
          _
        $region20: #{tpu_custom_call.1} parent=11 // pred_fallthru
          _
        // Predicated region
        $region21: #{tpu_custom_call.1} parent=11 // pred_check
          %p238 = pneg %p124
        $region22: #{tpu_custom_call.1} parent=11 // pred_check_branch
          %240 = sbr.rel (%p238) target = $region24
        $region23: #{tpu_custom_call.1} parent=11 // pred_region
          _
        $region24: #{tpu_custom_call.1} parent=11 // pred_fallthru
          _
        // Predicated region
        $region25: #{tpu_custom_call.1} parent=11 // pred_check
          %p241 = pneg %p145
        $region26: #{tpu_custom_call.1} parent=11 // pred_check_branch
          %243 = sbr.rel (%p241) target = $region28
        $region27: #{tpu_custom_call.1} parent=11 // pred_region
          _
        $region28: #{tpu_custom_call.1} parent=11 // pred_fallthru
          _
        // Predicated region
        $region29: #{tpu_custom_call.1} parent=11 // pred_check
          %p244 = pneg %p166
        $region30: #{tpu_custom_call.1} parent=11 // pred_check_branch
          %246 = sbr.rel (%p244) target = $region32
        $region31: #{tpu_custom_call.1} parent=11 // pred_region
          _
        $region32: #{tpu_custom_call.1} parent=11 // pred_fallthru
          _
        // Predicated region
        $region33: #{tpu_custom_call.1} parent=11 // pred_check
          %p247 = pneg %p187
        $region34: #{tpu_custom_call.1} parent=11 // pred_check_branch
          %249 = sbr.rel (%p247) target = $region36
        $region35: #{tpu_custom_call.1} parent=11 // pred_region
          _
        $region36: #{tpu_custom_call.1} parent=11 // pred_fallthru
          _
      $region12: #{tpu_custom_call.1} parent=5 // pred_fallthru
        _
      %p250 = scmp.lt.s32.totalorder %s16, 2
      // Predicated region
      $region37: #{tpu_custom_call.1} parent=5 // pred_check
        %p251 = pneg %p250
      $region38: #{tpu_custom_call.1} parent=5 // pred_check_branch
        %253 = sbr.rel (%p251) target = $region40
      $region39: #{tpu_custom_call.1} parent=5 // pred_region
        // Predicated region
        $region41: #{tpu_custom_call.1} parent=39 // pred_check
          %p254 = pneg %p76
        $region42: #{tpu_custom_call.1} parent=39 // pred_check_branch
          %256 = sbr.rel (%p254) target = $region44
        $region43: #{tpu_custom_call.1} parent=39 // pred_region
          %s257 = smul.u32 2, %s24
          %p258 = scmp.lt.s32.totalorder %s257, 3
          %s259 = scalar_select %p258, %s257, 3
          %p260 = scmp.lt.s32.totalorder %s23, 0
          %s261 = scalar_select %p260, %s23, 0
          %s262 = sadd.s32 %s261, %s259
          %s263 = smul.addr %s262, 2
          %s264 = scalar_lea.vmem %s2, %s263
          %s265 = smul.u32 2, %s24
        $region44: #{tpu_custom_call.1} parent=39 // pred_fallthru
          _
      $region40: #{tpu_custom_call.1} parent=5 // pred_fallthru
        _
      %p266 = scmp.le.s32.totalorder 1, %s16
      %p267 = scmp.lt.s32.totalorder %s16, 3
      %p268 = pnand %p266, %p267
      %p269 = pneg %p268
      // Predicated region
      $region45: #{tpu_custom_call.1} parent=5 // pred_check
        _
      $region46: #{tpu_custom_call.1} parent=5 // pred_check_branch
        %271 = sbr.rel (%p268) target = $region48
      $region47: #{tpu_custom_call.1} parent=5 // pred_region
        %s272 = ssub.s32 %s16, 1
        %p273 = scmp.lt.s32.totalorder %s25, 0
        %s274 = scalar_select %p273, %s25, 0
        %s275 = smul.addr %s274, 2
        %s276 = scalar_lea.vmem %s1, %s275
        %p277 = pneg %p54
        %p278 = pneg %p51
        %s279 = smul.u32 2, %s26
        %p280 = scmp.lt.s32.totalorder %s279, 3
        %s281 = scalar_select %p280, %s279, 3
        %p282 = scmp.lt.s32.totalorder %s25, 0
        %s283 = scalar_select %p282, %s25, 0
        %s284 = sadd.s32 %s283, %s281
        %s285 = smul.addr %s284, 2
        %s286 = scalar_lea.vmem %s2, %s285
        %p287 = pneg %p82
        %p288 = pneg %p79
        %p289 = pneg %p103
        %p290 = pneg %p100
        %p291 = pneg %p124
        %p292 = pneg %p121
        %p293 = pneg %p145
        %p294 = pneg %p142
        %p295 = pneg %p166
        %p296 = pneg %p163
        %p297 = pneg %p187
        %p298 = pneg %p184
        %p299 = pneg %p213
        %p300 = pneg %p210
        %p301 = scmp.lt.s32.totalorder %s25, 0
        %s302 = scalar_select %p301, %s25, 0
        %s303 = smul.addr %s302, 2
        %s304 = scalar_lea.vmem %s1, %s303
        %s305 = smul.u32 2, %s26
        %p306 = scmp.lt.s32.totalorder %s305, 3
        %s307 = scalar_select %p306, %s305, 3
        %p308 = scmp.lt.s32.totalorder %s25, 0
        %s309 = scalar_select %p308, %s25, 0
        %s310 = sadd.s32 %s309, %s307
        %s311 = smul.addr %s310, 2
        %s312 = scalar_lea.vmem %s2, %s311
        %s313 = smul.u32 2, %s26
        %s314 = smul.u32 %s26, 2
        %p315 = scmp.eq.s32.totalorder %s26, 0
        // Predicated region
        $region49: #{tpu_custom_call.1} parent=47 // pred_check
          %p316 = pneg %p315
        $region50: #{tpu_custom_call.1} parent=47 // pred_check_branch
          %318 = sbr.rel (%p316) target = $region52
        $region51: #{tpu_custom_call.1} parent=47 // pred_region
          %vm319 = vcmask 33792
          %320 = vst.msk [vmem:[#allocation2] sm:$0x3] %vm319, 0.0
          %321 = vst.msk [vmem:[#allocation3] sm:$0x3] %vm319, 0.0
        $region52: #{tpu_custom_call.1} parent=47 // pred_fallthru
          _
        %s322 = sld [smem:[#allocation6]]
        %p323 = scmp.lt.s32.totalorder %s314, %s322
        // Predicated region
        $region53: #{tpu_custom_call.1} parent=47 // pred_check
          %p324 = pneg %p323
        $region54: #{tpu_custom_call.1} parent=47 // pred_check_branch
          %326 = sbr.rel (%p324) target = $region56
        $region55: #{tpu_custom_call.1} parent=47 // pred_region
          %v327 = vld [vmem:[%s3] sm:$0x7]
          %v328 = vld [vmem:[%s5] sm:$0x1]
          %v329 = vld [vmem:[%s312] sm:$0x3]
          %v331 = vlaneseq
          %v332 = vshrl.u32 %v331, 7
          %v333 = vsub.s32 0, %v332
          %v334 = vrot.slane %v328, %v333
          %vm336 = vcmask 23552
          %v338 = vsel %vm336, %v329, 0
          %vm340 = vcmask 1042432
          %v342 = vsel %vm340, %v327, 0
          %344 = vmatprep.subr.mxu0 0.0
          %345 = vmatpush1.msra.mxu0 0.0
          %346 = vmatprep.subr.mxu0 0.0
          %347 = vmatpush1.msra.mxu0 0.0
          %348 = vmatprep.subr.mxu0 0.0
          %349 = vmatpush1.msra.mxu0 0.0
          %350 = vmatprep.subr.mxu0 0.0
          %351 = vmatpush1.msra.mxu0 0.0
          %352 = vmatprep.subr.mxu0 0.0
          %353 = vmatpush1.msra.mxu0 0.0
          %354 = vmatprep.subr.mxu0 0.0
          %355 = vmatpush1.msra.mxu0 0.0
          %356 = vmatprep.subr.mxu0 0.0
          %357 = vmatpush1.msra.mxu0 0.0
          %358 = vmatprep.subr.mxu0 0.0
          %359 = vmatpush1.msra.mxu0 0.0
          %360 = vmatprep.subr.mxu0 0.0
          %361 = vmatpush1.msra.mxu0 0.0
          %362 = vmatprep.subr.mxu0 0.0
          %363 = vmatpush1.msra.mxu0 0.0
          %364 = vmatprep.subr.mxu0 0.0
          %365 = vmatpush1.msra.mxu0 0.0
          %366 = vmatprep.subr.mxu0 0.0
          %367 = vmatpush1.msra.mxu0 0.0
          %368 = vmatprep.subr.mxu0 0.0
          %369 = vmatpush1.msra.mxu0 0.0
          %370 = vmatprep.subr.mxu0 0.0
          %371 = vmatpush1.msra.mxu0 0.0
          %372 = vmatprep.subr.mxu0 0.0
          %373 = vmatpush1.msra.mxu0 0.0
          %374 = vmatprep.subr.mxu0 0.0
          %375 = vmatpush1.msra.mxu0 %v342
          %376 = vmatprep.subr.mxu0 0.0
          %377 = vmatpush2.msra.mxu0 0.0
          %378 = vmatprep.subr.mxu0 0.0
          %379 = vmatpush2.msra.mxu0 0.0
          %380 = vmatprep.subr.mxu0 0.0
          %381 = vmatpush2.msra.mxu0 0.0
          %382 = vmatprep.subr.mxu0 0.0
          %383 = vmatpush2.msra.mxu0 0.0
          %384 = vmatprep.subr.mxu0 0.0
          %385 = vmatpush2.msra.mxu0 0.0
          %386 = vmatprep.subr.mxu0 0.0
          %387 = vmatpush2.msra.mxu0 0.0
          %388 = vmatprep.subr.mxu0 0.0
          %389 = vmatpush2.msra.mxu0 0.0
          %390 = vmatprep.subr.mxu0 0.0
          %391 = vmatpush2.msra.mxu0 0.0
          %392 = vmatprep.subr.mxu0 0.0
          %393 = vmatpush2.msra.mxu0 0.0
          %394 = vmatprep.subr.mxu0 0.0
          %395 = vmatpush2.msra.mxu0 0.0
          %396 = vmatprep.subr.mxu0 0.0
          %397 = vmatpush2.msra.mxu0 0.0
          %398 = vmatprep.subr.mxu0 0.0
          %399 = vmatpush2.msra.mxu0 0.0
          %400 = vmatprep.subr.mxu0 0.0
          %401 = vmatpush2.msra.mxu0 0.0
          %402 = vmatprep.subr.mxu0 0.0
          %403 = vmatpush2.msra.mxu0 0.0
          %404 = vmatprep.subr.mxu0 0.0
          %405 = vmatpush2.msra.mxu0 0.0
          %406 = vmatprep.subr.mxu0 0.0
          %407 = vmatpush2.msra.mxu0 0.0
          %408 = vmatprep.mubr.f32.mxu0 0.0
          %409 = vmatmul.mubr.f32.gmra.mxu0 %v338
          %v410 = vpop.f32.mrf.mxu0
          %v411 = vadd.f32 %v334, %v410
          %v412 = vpop.f32.mrf.mxu0
          %413 = vdwg.mxu0
          %vm414 = vcmask 156672
          %415 = vst.msk [vmem:[#allocation4] sm:$0x3] %vm414, %v411
          %s416 = scalar_lea.vmem %s312, 2
          %v417 = vld [vmem:[%s416] sm:$0x3]
          %v419 = vsel %vm336, %v417, 0
          %421 = vmatprep.subr.mxu0 0.0
          %422 = vmatpush1.msra.mxu0 0.0
          %423 = vmatprep.subr.mxu0 0.0
          %424 = vmatpush1.msra.mxu0 0.0
          %425 = vmatprep.subr.mxu0 0.0
          %426 = vmatpush1.msra.mxu0 0.0
          %427 = vmatprep.subr.mxu0 0.0
          %428 = vmatpush1.msra.mxu0 0.0
          %429 = vmatprep.subr.mxu0 0.0
          %430 = vmatpush1.msra.mxu0 0.0
          %431 = vmatprep.subr.mxu0 0.0
          %432 = vmatpush1.msra.mxu0 0.0
          %433 = vmatprep.subr.mxu0 0.0
          %434 = vmatpush1.msra.mxu0 0.0
          %435 = vmatprep.subr.mxu0 0.0
          %436 = vmatpush1.msra.mxu0 0.0
          %437 = vmatprep.subr.mxu0 0.0
          %438 = vmatpush1.msra.mxu0 0.0
          %439 = vmatprep.subr.mxu0 0.0
          %440 = vmatpush1.msra.mxu0 0.0
          %441 = vmatprep.subr.mxu0 0.0
          %442 = vmatpush1.msra.mxu0 0.0
          %443 = vmatprep.subr.mxu0 0.0
          %444 = vmatpush1.msra.mxu0 0.0
          %445 = vmatprep.subr.mxu0 0.0
          %446 = vmatpush1.msra.mxu0 0.0
          %447 = vmatprep.subr.mxu0 0.0
          %448 = vmatpush1.msra.mxu0 0.0
          %449 = vmatprep.subr.mxu0 0.0
          %450 = vmatpush1.msra.mxu0 0.0
          %451 = vmatprep.subr.mxu0 0.0
          %452 = vmatpush1.msra.mxu0 %v342
          %453 = vmatprep.subr.mxu0 0.0
          %454 = vmatpush2.msra.mxu0 0.0
          %455 = vmatprep.subr.mxu0 0.0
          %456 = vmatpush2.msra.mxu0 0.0
          %457 = vmatprep.subr.mxu0 0.0
          %458 = vmatpush2.msra.mxu0 0.0
          %459 = vmatprep.subr.mxu0 0.0
          %460 = vmatpush2.msra.mxu0 0.0
          %461 = vmatprep.subr.mxu0 0.0
          %462 = vmatpush2.msra.mxu0 0.0
          %463 = vmatprep.subr.mxu0 0.0
          %464 = vmatpush2.msra.mxu0 0.0
          %465 = vmatprep.subr.mxu0 0.0
          %466 = vmatpush2.msra.mxu0 0.0
          %467 = vmatprep.subr.mxu0 0.0
          %468 = vmatpush2.msra.mxu0 0.0
          %469 = vmatprep.subr.mxu0 0.0
          %470 = vmatpush2.msra.mxu0 0.0
          %471 = vmatprep.subr.mxu0 0.0
          %472 = vmatpush2.msra.mxu0 0.0
          %473 = vmatprep.subr.mxu0 0.0
          %474 = vmatpush2.msra.mxu0 0.0
          %475 = vmatprep.subr.mxu0 0.0
          %476 = vmatpush2.msra.mxu0 0.0
          %477 = vmatprep.subr.mxu0 0.0
          %478 = vmatpush2.msra.mxu0 0.0
          %479 = vmatprep.subr.mxu0 0.0
          %480 = vmatpush2.msra.mxu0 0.0
          %481 = vmatprep.subr.mxu0 0.0
          %482 = vmatpush2.msra.mxu0 0.0
          %483 = vmatprep.subr.mxu0 0.0
          %484 = vmatpush2.msra.mxu0 0.0
          %485 = vmatprep.mubr.f32.mxu0 0.0
          %486 = vmatmul.mubr.f32.gmra.mxu0 %v419
          %v487 = vpop.f32.mrf.mxu0
          %v488 = vadd.f32 %v334, %v487
          %v489 = vpop.f32.mrf.mxu0
          %490 = vdwg.mxu0
          %s491 = scalar_lea.vmem [#allocation4], 2
          %492 = vst.msk [vmem:[%s491] sm:$0x3] %vm414, %v488
          %v493 = vld [vmem:[%s4] sm:$0x1f]
          %v494 = vld [vmem:[%s304] sm:$0x3]
          %v495 = vld [vmem:[#allocation2] sm:$0x3]
          %v496 = vld [vmem:[#allocation3] sm:$0x3]
          %v497 = vld [vmem:[#allocation4] sm:$0x3]
          %vm498 = vcmask 39936
          %v500 = vsel %vm498, %v495, 0
          %vm502 = vcmask 1044480
          %v504 = vsel %vm502, %v493, 0
          %506 = vmatprep.subr.mxu0 0.0
          %507 = vmatpush1.msra.mxu0 0.0
          %508 = vmatprep.subr.mxu0 0.0
          %509 = vmatpush1.msra.mxu0 0.0
          %510 = vmatprep.subr.mxu0 0.0
          %511 = vmatpush1.msra.mxu0 0.0
          %512 = vmatprep.subr.mxu0 0.0
          %513 = vmatpush1.msra.mxu0 0.0
          %514 = vmatprep.subr.mxu0 0.0
          %515 = vmatpush1.msra.mxu0 0.0
          %516 = vmatprep.subr.mxu0 0.0
          %517 = vmatpush1.msra.mxu0 0.0
          %518 = vmatprep.subr.mxu0 0.0
          %519 = vmatpush1.msra.mxu0 0.0
          %520 = vmatprep.subr.mxu0 0.0
          %521 = vmatpush1.msra.mxu0 0.0
          %522 = vmatprep.subr.mxu0 0.0
          %523 = vmatpush1.msra.mxu0 0.0
          %524 = vmatprep.subr.mxu0 0.0
          %525 = vmatpush1.msra.mxu0 0.0
          %526 = vmatprep.subr.mxu0 0.0
          %527 = vmatpush1.msra.mxu0 0.0
          %528 = vmatprep.subr.mxu0 0.0
          %529 = vmatpush1.msra.mxu0 0.0
          %530 = vmatprep.subr.mxu0 0.0
          %531 = vmatpush1.msra.mxu0 0.0
          %532 = vmatprep.subr.mxu0 0.0
          %533 = vmatpush1.msra.mxu0 0.0
          %534 = vmatprep.subr.mxu0 0.0
          %535 = vmatpush1.msra.mxu0 0.0
          %536 = vmatprep.subr.mxu0 0.0
          %537 = vmatpush1.msra.mxu0 %v504
          %538 = vmatprep.subr.mxu0 0.0
          %539 = vmatpush2.msra.mxu0 0.0
          %540 = vmatprep.subr.mxu0 0.0
          %541 = vmatpush2.msra.mxu0 0.0
          %542 = vmatprep.subr.mxu0 0.0
          %543 = vmatpush2.msra.mxu0 0.0
          %544 = vmatprep.subr.mxu0 0.0
          %545 = vmatpush2.msra.mxu0 0.0
          %546 = vmatprep.subr.mxu0 0.0
          %547 = vmatpush2.msra.mxu0 0.0
          %548 = vmatprep.subr.mxu0 0.0
          %549 = vmatpush2.msra.mxu0 0.0
          %550 = vmatprep.subr.mxu0 0.0
          %551 = vmatpush2.msra.mxu0 0.0
          %552 = vmatprep.subr.mxu0 0.0
          %553 = vmatpush2.msra.mxu0 0.0
          %554 = vmatprep.subr.mxu0 0.0
          %555 = vmatpush2.msra.mxu0 0.0
          %556 = vmatprep.subr.mxu0 0.0
          %557 = vmatpush2.msra.mxu0 0.0
          %558 = vmatprep.subr.mxu0 0.0
          %559 = vmatpush2.msra.mxu0 0.0
          %560 = vmatprep.subr.mxu0 0.0
          %561 = vmatpush2.msra.mxu0 0.0
          %562 = vmatprep.subr.mxu0 0.0
          %563 = vmatpush2.msra.mxu0 0.0
          %564 = vmatprep.subr.mxu0 0.0
          %565 = vmatpush2.msra.mxu0 0.0
          %566 = vmatprep.subr.mxu0 0.0
          %567 = vmatpush2.msra.mxu0 0.0
          %568 = vmatprep.subr.mxu0 0.0
          %569 = vmatpush2.msra.mxu0 0.0
          %570 = vmatprep.mubr.f32.mxu0 0.0
          %571 = vmatmul.mubr.f32.gmra.mxu0 %v500
          %v572 = vpop.f32.mrf.mxu0
          %v573 = vadd.f32 0.0, %v572
          %v574 = vpop.f32.mrf.mxu0
          %575 = vdwg.mxu0
          %v576 = vadd.f32 %v497, %v573
          %v577 = vxor.u32 %v576, 2147483648
          %v578 = vmul.f32 %v577, 1.442695
          %v579 = vpow.pop %v578
          %v580 = vadd.f32 %v579, 1.0
          %v581 = vrcp.pop %v580
          %v582 = vmul.f32 1.0, %v581
          %v583 = vtanh.pop %v576
          %585 = vrot.lane.b32.xlu0 %v496, 5
          %v586 = vpop.permute.xlu0 %585
          %v588 = vmul.f32 %v582, %v586
          %590 = vrot.lane.b32.xlu0 %v583, 118
          %v591 = vpop.permute.xlu0 %590
          %v593 = vmul.f32 %v582, %v591
          %595 = vrot.lane.b32.xlu0 %v593, 5
          %v596 = vpop.permute.xlu0 %595
          %v598 = vadd.f32 %v588, %v596
          %v599 = vtanh.pop %v598
          %601 = vrot.lane.b32.xlu0 %v599, 10
          %v602 = vpop.permute.xlu0 %601
          %v604 = vmul.f32 %v582, %v602
          %v605 = vstv %s314
          %vm606 = vcmp.lt.s32.totalorder %v605, %v494
          %v607 = vsel %vm606, 1, 0
          %608 = vset.pattern.permute.xlu0 0
          %609 = vperm.xlu0 %608, %v607
          %v610 = vpop.permute.xlu0 %609
          %vm611 = vcmp.eq.s32.totalorder %v610, 1
          %612 = vrot.lane.b32.xlu0 %v495, 15
          %v613 = vpop.permute.xlu0 %612
          %v615 = vsel %vm611, %v604, %v613
          %v616 = vsel %vm611, %v598, %v586
          %v617 = vld [vmem:[%s491] sm:$0x3]
          %619 = vrot.lane.b32.xlu0 %v615, 113
          %v620 = vpop.permute.xlu0 %619
          %v621 = vsel %vm498, %v620, 0
          %623 = vmatprep.subr.mxu0 0.0
          %624 = vmatpush1.msra.mxu0 0.0
          %625 = vmatprep.subr.mxu0 0.0
          %626 = vmatpush1.msra.mxu0 0.0
          %627 = vmatprep.subr.mxu0 0.0
          %628 = vmatpush1.msra.mxu0 0.0
          %629 = vmatprep.subr.mxu0 0.0
          %630 = vmatpush1.msra.mxu0 0.0
          %631 = vmatprep.subr.mxu0 0.0
          %632 = vmatpush1.msra.mxu0 0.0
          %633 = vmatprep.subr.mxu0 0.0
          %634 = vmatpush1.msra.mxu0 0.0
          %635 = vmatprep.subr.mxu0 0.0
          %636 = vmatpush1.msra.mxu0 0.0
          %637 = vmatprep.subr.mxu0 0.0
          %638 = vmatpush1.msra.mxu0 0.0
          %639 = vmatprep.subr.mxu0 0.0
          %640 = vmatpush1.msra.mxu0 0.0
          %641 = vmatprep.subr.mxu0 0.0
          %642 = vmatpush1.msra.mxu0 0.0
          %643 = vmatprep.subr.mxu0 0.0
          %644 = vmatpush1.msra.mxu0 0.0
          %645 = vmatprep.subr.mxu0 0.0
          %646 = vmatpush1.msra.mxu0 0.0
          %647 = vmatprep.subr.mxu0 0.0
          %648 = vmatpush1.msra.mxu0 0.0
          %649 = vmatprep.subr.mxu0 0.0
          %650 = vmatpush1.msra.mxu0 0.0
          %651 = vmatprep.subr.mxu0 0.0
          %652 = vmatpush1.msra.mxu0 0.0
          %653 = vmatprep.subr.mxu0 0.0
          %654 = vmatpush1.msra.mxu0 %v504
          %655 = vmatprep.subr.mxu0 0.0
          %656 = vmatpush2.msra.mxu0 0.0
          %657 = vmatprep.subr.mxu0 0.0
          %658 = vmatpush2.msra.mxu0 0.0
          %659 = vmatprep.subr.mxu0 0.0
          %660 = vmatpush2.msra.mxu0 0.0
          %661 = vmatprep.subr.mxu0 0.0
          %662 = vmatpush2.msra.mxu0 0.0
          %663 = vmatprep.subr.mxu0 0.0
          %664 = vmatpush2.msra.mxu0 0.0
          %665 = vmatprep.subr.mxu0 0.0
          %666 = vmatpush2.msra.mxu0 0.0
          %667 = vmatprep.subr.mxu0 0.0
          %668 = vmatpush2.msra.mxu0 0.0
          %669 = vmatprep.subr.mxu0 0.0
          %670 = vmatpush2.msra.mxu0 0.0
          %671 = vmatprep.subr.mxu0 0.0
          %672 = vmatpush2.msra.mxu0 0.0
          %673 = vmatprep.subr.mxu0 0.0
          %674 = vmatpush2.msra.mxu0 0.0
          %675 = vmatprep.subr.mxu0 0.0
          %676 = vmatpush2.msra.mxu0 0.0
          %677 = vmatprep.subr.mxu0 0.0
          %678 = vmatpush2.msra.mxu0 0.0
          %679 = vmatprep.subr.mxu0 0.0
          %680 = vmatpush2.msra.mxu0 0.0
          %681 = vmatprep.subr.mxu0 0.0
          %682 = vmatpush2.msra.mxu0 0.0
          %683 = vmatprep.subr.mxu0 0.0
          %684 = vmatpush2.msra.mxu0 0.0
          %685 = vmatprep.subr.mxu0 0.0
          %686 = vmatpush2.msra.mxu0 0.0
          %687 = vmatprep.mubr.f32.mxu0 0.0
          %688 = vmatmul.mubr.f32.gmra.mxu0 %v621
          %v689 = vpop.f32.mrf.mxu0
          %v690 = vadd.f32 0.0, %v689
          %v691 = vpop.f32.mrf.mxu0
          %692 = vdwg.mxu0
          %v693 = vadd.f32 %v617, %v690
          %v694 = vxor.u32 %v693, 2147483648
          %v695 = vmul.f32 %v694, 1.442695
          %v696 = vpow.pop %v695
          %v697 = vadd.f32 %v696, 1.0
          %v698 = vrcp.pop %v697
          %v699 = vmul.f32 1.0, %v698
          %v700 = vtanh.pop %v693
          %v701 = vmul.f32 %v699, %v616
          %703 = vrot.lane.b32.xlu0 %v700, 118
          %v704 = vpop.permute.xlu0 %703
          %v706 = vmul.f32 %v699, %v704
          %708 = vrot.lane.b32.xlu0 %v706, 5
          %v709 = vpop.permute.xlu0 %708
          %v711 = vadd.f32 %v701, %v709
          %v712 = vtanh.pop %v711
          %714 = vrot.lane.b32.xlu0 %v712, 10
          %v715 = vpop.permute.xlu0 %714
          %v717 = vmul.f32 %v699, %v715
          %s718 = sadd.s32 %s314, 1
          %v719 = vstv %s718
          %vm720 = vcmp.lt.s32.totalorder %v719, %v494
          %v721 = vsel %vm720, 1, 0
          %722 = vset.pattern.permute.xlu0 0
          %723 = vperm.xlu0 %722, %v721
          %v724 = vpop.permute.xlu0 %723
          %vm725 = vcmp.eq.s32.totalorder %v724, 1
          %v726 = vsel %vm725, %v717, %v615
          %v727 = vsel %vm725, %v711, %v616
          %729 = vrot.lane.b32.xlu0 %v726, 113
          %v730 = vpop.permute.xlu0 %729
          %vm732 = vcmask 33792
          %733 = vst.msk [vmem:[#allocation2] sm:$0x3] %vm732, %v730
          %735 = vrot.lane.b32.xlu0 %v727, 123
          %v736 = vpop.permute.xlu0 %735
          %738 = vst.msk [vmem:[#allocation3] sm:$0x3] %vm732, %v736
        $region56: #{tpu_custom_call.1} parent=47 // pred_fallthru
          _
        %p739 = scmp.eq.s32.totalorder %s26, 1
        // Predicated region
        $region57: #{tpu_custom_call.1} parent=47 // pred_check
          %p740 = pneg %p739
        $region58: #{tpu_custom_call.1} parent=47 // pred_check_branch
          %742 = sbr.rel (%p740) target = $region60
        $region59: #{tpu_custom_call.1} parent=47 // pred_region
          %v743 = vld [vmem:[#allocation2] sm:$0x3]
          %v744 = vld [vmem:[%s6] sm:$0x1f]
          %v745 = vld [vmem:[%s7] sm:$0x1]
          %v747 = vlaneseq
          %v748 = vshrl.u32 %v747, 7
          %v749 = vsub.s32 0, %v748
          %v750 = vrot.slane %v745, %v749
          %vm752 = vcmask 39936
          %v754 = vsel %vm752, %v743, 0
          %vm756 = vcmask 1044480
          %v758 = vsel %vm756, %v744, 0
          %760 = vmatprep.subr.mxu0 0.0
          %761 = vmatpush1.msra.mxu0 0.0
          %762 = vmatprep.subr.mxu0 0.0
          %763 = vmatpush1.msra.mxu0 0.0
          %764 = vmatprep.subr.mxu0 0.0
          %765 = vmatpush1.msra.mxu0 0.0
          %766 = vmatprep.subr.mxu0 0.0
          %767 = vmatpush1.msra.mxu0 0.0
          %768 = vmatprep.subr.mxu0 0.0
          %769 = vmatpush1.msra.mxu0 0.0
          %770 = vmatprep.subr.mxu0 0.0
          %771 = vmatpush1.msra.mxu0 0.0
          %772 = vmatprep.subr.mxu0 0.0
          %773 = vmatpush1.msra.mxu0 0.0
          %774 = vmatprep.subr.mxu0 0.0
          %775 = vmatpush1.msra.mxu0 0.0
          %776 = vmatprep.subr.mxu0 0.0
          %777 = vmatpush1.msra.mxu0 0.0
          %778 = vmatprep.subr.mxu0 0.0
          %779 = vmatpush1.msra.mxu0 0.0
          %780 = vmatprep.subr.mxu0 0.0
          %781 = vmatpush1.msra.mxu0 0.0
          %782 = vmatprep.subr.mxu0 0.0
          %783 = vmatpush1.msra.mxu0 0.0
          %784 = vmatprep.subr.mxu0 0.0
          %785 = vmatpush1.msra.mxu0 0.0
          %786 = vmatprep.subr.mxu0 0.0
          %787 = vmatpush1.msra.mxu0 0.0
          %788 = vmatprep.subr.mxu0 0.0
          %789 = vmatpush1.msra.mxu0 0.0
          %790 = vmatprep.subr.mxu0 0.0
          %791 = vmatpush1.msra.mxu0 %v758
          %792 = vmatprep.subr.mxu0 0.0
          %793 = vmatpush2.msra.mxu0 0.0
          %794 = vmatprep.subr.mxu0 0.0
          %795 = vmatpush2.msra.mxu0 0.0
          %796 = vmatprep.subr.mxu0 0.0
          %797 = vmatpush2.msra.mxu0 0.0
          %798 = vmatprep.subr.mxu0 0.0
          %799 = vmatpush2.msra.mxu0 0.0
          %800 = vmatprep.subr.mxu0 0.0
          %801 = vmatpush2.msra.mxu0 0.0
          %802 = vmatprep.subr.mxu0 0.0
          %803 = vmatpush2.msra.mxu0 0.0
          %804 = vmatprep.subr.mxu0 0.0
          %805 = vmatpush2.msra.mxu0 0.0
          %806 = vmatprep.subr.mxu0 0.0
          %807 = vmatpush2.msra.mxu0 0.0
          %808 = vmatprep.subr.mxu0 0.0
          %809 = vmatpush2.msra.mxu0 0.0
          %810 = vmatprep.subr.mxu0 0.0
          %811 = vmatpush2.msra.mxu0 0.0
          %812 = vmatprep.subr.mxu0 0.0
          %813 = vmatpush2.msra.mxu0 0.0
          %814 = vmatprep.subr.mxu0 0.0
          %815 = vmatpush2.msra.mxu0 0.0
          %816 = vmatprep.subr.mxu0 0.0
          %817 = vmatpush2.msra.mxu0 0.0
          %818 = vmatprep.subr.mxu0 0.0
          %819 = vmatpush2.msra.mxu0 0.0
          %820 = vmatprep.subr.mxu0 0.0
          %821 = vmatpush2.msra.mxu0 0.0
          %822 = vmatprep.subr.mxu0 0.0
          %823 = vmatpush2.msra.mxu0 0.0
          %824 = vmatprep.mubr.f32.mxu0 0.0
          %825 = vmatmul.mubr.f32.gmra.mxu0 %v754
          %v826 = vpop.f32.mrf.mxu0
          %v827 = vadd.f32 %v750, %v826
          %v828 = vpop.f32.mrf.mxu0
          %829 = vdwg.mxu0
          %vm830 = vcmask 9216
          %v831 = vsel %vm830, %v827, -inf
          %832 = vmax.xlane.f32.xlu0 %v831
          %v833 = vpop.xlane.xlu0 %832
          %v834 = vsub.f32 %v827, %v833
          %v835 = vmul.f32 %v834, 1.442695
          %v836 = vpow.pop %v835
          %v837 = vsel %vm830, %v836, 0.0
          %838 = vadd.xlane.f32.xlu0 %v837
          %v839 = vpop.xlane.xlu0 %838
          %v840 = vlog2.pop %v839
          %v841 = vmul.f32 %v840, 0.6931472
          %v842 = vsub.f32 %v834, %v841
          %843 = vst.msk [vmem:[#allocation7] sm:$0x3] %vm830, %v842
        $region60: #{tpu_custom_call.1} parent=47 // pred_fallthru
          _
        // Predicated region
        $region61: #{tpu_custom_call.1} parent=47 // pred_check
          %p844 = pneg %p210
        $region62: #{tpu_custom_call.1} parent=47 // pred_check_branch
          %846 = sbr.rel (%p844) target = $region64
        $region63: #{tpu_custom_call.1} parent=47 // pred_region
          %s848 = ssub.s32 32, 32
          %849 = vsyncadd [#allocation8], %s848
          %s850 = smul.addr %s25, 32
          %s851 = scalar_lea.hbm %s8, %s850
          %s853 = sshll.u32 [#allocation7], 4
          %s854 = int_to_ptr.vmem [resolvable:$true] %s853
          %856 = dma.vmem_to_hbm [thread:$0]  %s854, 32, %s851, [#allocation8]
        $region64: #{tpu_custom_call.1} parent=47 // pred_fallthru
          _
        // Predicated region
        $region65: #{tpu_custom_call.1} parent=47 // pred_check
          %p857 = pneg %p210
        $region66: #{tpu_custom_call.1} parent=47 // pred_check_branch
          %859 = sbr.rel (%p857) target = $region68
        $region67: #{tpu_custom_call.1} parent=47 // pred_region
          %860 = dma.done [#allocation8], 32
        $region68: #{tpu_custom_call.1} parent=47 // pred_fallthru
          _
      $region48: #{tpu_custom_call.1} parent=5 // pred_fallthru
        _
      %p861 = scmp.le.s32.totalorder 2, %s16
      // Predicated region
      $region69: #{tpu_custom_call.1} parent=5 // pred_check
        %p862 = pneg %p861
      $region70: #{tpu_custom_call.1} parent=5 // pred_check_branch
        %864 = sbr.rel (%p862) target = $region72
      $region71: #{tpu_custom_call.1} parent=5 // pred_region
        %s865 = ssub.s32 %s16, 2
      $region72: #{tpu_custom_call.1} parent=5 // pred_fallthru
        _
    $region6: #{tpu_custom_call.1} parent=1 // loop_footer
      %s20 = sadd.s32 1, %s16
    $region7: #{tpu_custom_call.1} parent=1 // loop_footer_branch
      %15 = sbr.rel target = $region3
    $region8: #{tpu_custom_call.1} parent=1 // loop_exit
      _
    %866 = vsyncpa [#allocation8], 1
    %s867 = scalar_lea.sflag [#allocation8], 1
    %868 = vsyncpa %s867, 1

</llo_original>
